<compile_context>
chip_gen: v7x
topology: tpu7x:2x2x1
jax: 0.10.0
libtpu: 0.0.40
codegen_flags: <defaults>
</compile_context>

<pallas_src>
import functools
import math

import jax
import jax.numpy as jnp
from jax.experimental import pallas as pl
from jax.experimental.pallas import tpu as pltpu


# ---------------------------------------------------------------------------
# helpers
# ---------------------------------------------------------------------------
def _apply_activation(x, activation):
    if activation is None:
        return x
    if activation == "relu":
        return jnp.maximum(x, 0.0)
    if activation == "relu6":
        return jnp.clip(x, 0.0, 6.0)
    if activation == "leaky_relu":
        return jnp.where(x >= 0.0, x, 0.01 * x)
    if activation == "elu":
        return jnp.where(x > 0.0, x, jnp.expm1(x))
    if activation == "selu":
        alpha = 1.6732632423543772
        scale = 1.0507009873554805
        return scale * jnp.where(x > 0.0, x, alpha * jnp.expm1(x))
    if activation == "celu":
        return jnp.where(x > 0.0, x, jnp.expm1(x))
    raise ValueError(f"unsupported activation: {activation}")


def _vmem_limit(nbytes_estimate):
    # Explicit scoped-VMEM limit: above v5e's 16 MiB default, with headroom, but
    # never above v7x's 64 MiB physical VMEM.
    return int(min(max(2 * int(nbytes_estimate), 32 * 1024 * 1024), 64 * 1024 * 1024))


# ---------------------------------------------------------------------------
# Kernel 1: fused dual 2-layer LinearLayer stacks (key path + value path)
#   key   = act(act(x@Wk1 + bk1)@Wk2 + bk2)
#   value = act(act(x@Wv1 + bv1)@Wv2 + bv2)
# x is read from HBM once per row tile; weights stay VMEM-resident.
# ---------------------------------------------------------------------------
def _mlp2_dual_kernel(x_ref, wk1_ref, bk1_ref, wk2_ref, bk2_ref,
                      wv1_ref, bv1_ref, wv2_ref, bv2_ref,
                      key_out_ref, value_out_ref, *, activation):
    x = x_ref[...]                                           # already matmul dtype

    hk = jnp.dot(x, wk1_ref[...], preferred_element_type=jnp.float32)      # MXU
    hk = _apply_activation(hk + bk1_ref[...], activation)
    k = jnp.dot(hk.astype(wk2_ref.dtype), wk2_ref[...],
                preferred_element_type=jnp.float32)                        # MXU
    k = _apply_activation(k + bk2_ref[...], activation)
    key_out_ref[...] = k.astype(key_out_ref.dtype)

    hv = jnp.dot(x, wv1_ref[...], preferred_element_type=jnp.float32)      # MXU
    hv = _apply_activation(hv + bv1_ref[...], activation)
    v = jnp.dot(hv.astype(wv2_ref.dtype), wv2_ref[...],
                preferred_element_type=jnp.float32)                        # MXU
    v = _apply_activation(v + bv2_ref[...], activation)
    value_out_ref[...] = v.astype(value_out_ref.dtype)


def dual_linear_stack_2(x, key_params, value_params, *, activation=None,
                        matmul_dtype=jnp.float32, block_rows=512):
    """Two torch 2-layer LinearLayer stacks sharing the same input tensor."""
    wk1, bk1, wk2, bk2 = key_params
    wv1, bv1, wv2, bv2 = value_params
    n, f_in = x.shape
    hk1, fk_out = wk1.shape[0], wk2.shape[0]
    hv1, fv_out = wv1.shape[0], wv2.shape[0]
    assert wk1.shape == (hk1, f_in) and wk2.shape == (fk_out, hk1)
    assert wv1.shape == (hv1, f_in) and wv2.shape == (fv_out, hv1)
    assert bk1.shape == (hk1,) and bk2.shape == (fk_out,)
    assert bv1.shape == (hv1,) and bv2.shape == (fv_out,)

    # Wrapper-side dtype casts (not per-grid-step in the kernel): halves HBM DMA
    # bytes and resident-weight VMEM in bf16 and feeds the MXU at full rate.
    x_c = x.astype(matmul_dtype)
    wk1t = jnp.asarray(wk1).T.astype(matmul_dtype)
    wk2t = jnp.asarray(wk2).T.astype(matmul_dtype)
    wv1t = jnp.asarray(wv1).T.astype(matmul_dtype)
    wv2t = jnp.asarray(wv2).T.astype(matmul_dtype)
    bk1r = jnp.asarray(bk1, jnp.float32).reshape(1, hk1)
    bk2r = jnp.asarray(bk2, jnp.float32).reshape(1, fk_out)
    bv1r = jnp.asarray(bv1, jnp.float32).reshape(1, hv1)
    bv2r = jnp.asarray(bv2, jnp.float32).reshape(1, fv_out)

    tn = n if n <= block_rows else block_rows
    grid = (pl.cdiv(n, tn),)

    itm = jnp.dtype(matmul_dtype).itemsize
    w_bytes = itm * (f_in * (hk1 + hv1) + hk1 * fk_out + hv1 * fv_out)
    flops = 2 * n * (f_in * (hk1 + hv1) + hk1 * fk_out + hv1 * fv_out)
    bytes_accessed = (itm * n * f_in + w_bytes
                      + 4 * (hk1 + fk_out + hv1 + fv_out)
                      + 4 * n * fk_out + itm * n * fv_out)
    vmem_est = (2 * tn * f_in * itm + 2 * w_bytes
                + 2 * 4 * (hk1 + fk_out + hv1 + fv_out)
                + 2 * tn * (4 * fk_out + itm * fv_out)
                + 4 * tn * (hk1 + hv1))

    kernel = functools.partial(_mlp2_dual_kernel, activation=activation)
    key_out, value_out = pl.pallas_call(
        kernel,
        out_shape=(jax.ShapeDtypeStruct((n, fk_out), jnp.float32),
                   jax.ShapeDtypeStruct((n, fv_out), matmul_dtype)),
        grid=grid,
        in_specs=[
            pl.BlockSpec((tn, f_in), lambda i: (i, 0)),     # row-tiled activations
            pl.BlockSpec((f_in, hk1), lambda i: (0, 0)),    # resident key weights
            pl.BlockSpec((1, hk1), lambda i: (0, 0)),
            pl.BlockSpec((hk1, fk_out), lambda i: (0, 0)),
            pl.BlockSpec((1, fk_out), lambda i: (0, 0)),
            pl.BlockSpec((f_in, hv1), lambda i: (0, 0)),    # resident value weights
            pl.BlockSpec((1, hv1), lambda i: (0, 0)),
            pl.BlockSpec((hv1, fv_out), lambda i: (0, 0)),
            pl.BlockSpec((1, fv_out), lambda i: (0, 0)),
        ],
        out_specs=(pl.BlockSpec((tn, fk_out), lambda i: (i, 0)),
                   pl.BlockSpec((tn, fv_out), lambda i: (i, 0))),
        compiler_params=pltpu.CompilerParams(
            dimension_semantics=("parallel",),
            vmem_limit_bytes=_vmem_limit(vmem_est)),
        cost_estimate=pl.CostEstimate(flops=flops, transcendentals=0,
                                      bytes_accessed=int(bytes_accessed)),
    )(x_c, wk1t, bk1r, wk2t, bk2r, wv1t, bv1r, wv2t, bv2r)
    return key_out, value_out


# ---------------------------------------------------------------------------
# Kernel 2: scaled softmax over the last (lane) axis — _calculate_self_attention
# (H*L is tiny relative to everything else; single full-block kernel.)
# ---------------------------------------------------------------------------
def _scaled_softmax_kernel(k_ref, out_ref, *, scale, approx_recip):
    x = k_ref[...].astype(jnp.float32) * scale
    m = jnp.max(x, axis=-1, keepdims=True)
    e = jnp.exp(x - m)
    s = jnp.sum(e, axis=-1, keepdims=True)
    if approx_recip:
        out_ref[...] = (e * pl.reciprocal(s, approx=True)).astype(out_ref.dtype)
    else:
        out_ref[...] = (e / s).astype(out_ref.dtype)


def scaled_softmax(key_hn, *, in_feats, approx_recip=False):
    """softmax(key / sqrt(in_feats)) along the last axis.  key_hn: [H, L]."""
    h, l = key_hn.shape
    kernel = functools.partial(_scaled_softmax_kernel,
                               scale=1.0 / math.sqrt(in_feats),
                               approx_recip=approx_recip)
    return pl.pallas_call(
        kernel,
        out_shape=jax.ShapeDtypeStruct((h, l), jnp.float32),
        grid=(1,),
        in_specs=[pl.BlockSpec((h, l), lambda i: (0, 0))],
        out_specs=pl.BlockSpec((h, l), lambda i: (0, 0)),
        compiler_params=pltpu.CompilerParams(
            dimension_semantics=("arbitrary",),
            vmem_limit_bytes=_vmem_limit(4 * 8 * h * l)),
        cost_estimate=pl.CostEstimate(flops=4 * h * l, transcendentals=h * l,
                                      bytes_accessed=8 * h * l),
    )(key_hn)


# ---------------------------------------------------------------------------
# Kernel 3: row-tiled per-head message passing + head pooling (fused)
#   out[i] = pool_h( proj[h, i_tile] @ value[h] ) * row_scale[i_tile]
# grid = (row_tiles ["parallel"], heads ["arbitrary" reduction, trailing]).
# The f32 output block is resident across the head axis and used directly as the
# accumulator; row scaling + mean pooling are applied once in the finalize step.
# ---------------------------------------------------------------------------
def _attn_message_pool_kernel(proj_ref, value_ref, scale_ref, out_ref, *,
                              head_pooling_type, num_heads):
    h = pl.program_id(1)

    @pl.when(h == 0)
    def _():
        out_ref[...] = jnp.zeros_like(out_ref)

    # Hot loop: pure DMA + MXU (no per-head row-scale broadcast on the VPU).
    out_ref[...] += jnp.dot(proj_ref[0], value_ref[0],
                            preferred_element_type=jnp.float32)

    @pl.when(h == num_heads - 1)
    def _():
        y = out_ref[...] * scale_ref[...]            # hoisted row scaling (TM x F)
        if head_pooling_type == "mean":
            y = y * (1.0 / num_heads)
        out_ref[...] = y


def attention_message_pool(proj, value, row_scale, *, head_pooling_type,
                           block_rows=512):
    """proj [H,L,L] (matmul dtype), value [H,L,F] (matmul dtype), row_scale [L,1] f32
    -> pooled messages [L, F] f32."""
    num_heads, l, _ = proj.shape
    f = value.shape[-1]
    tm = l if l <= block_rows else block_rows
    grid = (pl.cdiv(l, tm), num_heads)

    kernel = functools.partial(_attn_message_pool_kernel,
                               head_pooling_type=head_pooling_type,
                               num_heads=num_heads)
    itp = jnp.dtype(proj.dtype).itemsize
    itv = jnp.dtype(value.dtype).itemsize
    flops = 2 * num_heads * l * l * f
    bytes_accessed = itp * num_heads * l * l + itv * num_heads * l * f + 4 * (l * f + l)
    vmem_est = 2 * tm * l * itp + 2 * l * f * itv + 2 * tm * 4 + 2 * tm * f * 4

    return pl.pallas_call(
        kernel,
        out_shape=jax.ShapeDtypeStruct((l, f), jnp.float32),
        grid=grid,
        in_specs=[
            pl.BlockSpec((1, tm, l), lambda i, h: (h, i, 0)),   # per-head row tile
            pl.BlockSpec((1, l, f), lambda i, h: (h, 0, 0)),    # per-head values
            pl.BlockSpec((tm, 1), lambda i, h: (i, 0)),         # row scaling
        ],
        out_specs=pl.BlockSpec((tm, f), lambda i, h: (i, 0)),   # resident accumulator
        compiler_params=pltpu.CompilerParams(
            dimension_semantics=("parallel", "arbitrary"),
            vmem_limit_bytes=_vmem_limit(vmem_est)),
        cost_estimate=pl.CostEstimate(flops=flops, transcendentals=0,
                                      bytes_accessed=int(bytes_accessed)),
    )(proj, value, row_scale)


# ---------------------------------------------------------------------------
# Full MutualMultiAttentionHead forward
# ---------------------------------------------------------------------------
def mutual_multi_attention_head_forward(
        params, node_inputs, edge_inputs, g_src, g_dst, lg_src, lg_dst, *,
        num_heads, node_in_feats, edge_in_feats,
        message_aggregation_type="sum", head_pooling_type="sum",
        linear_projection_activation=None, dropout_probability=0.0,
        matmul_dtype=jnp.float32, approx_recip=False):
    assert head_pooling_type in ("sum", "mean")
    # TODO(synk): training-mode nn.Dropout is not implemented (identity for p=0 / eval).
    assert dropout_probability == 0.0

    n_nodes = node_inputs.shape[0]
    n_edges = edge_inputs.shape[0]
    h = num_heads
    act = linear_projection_activation

    # --- fused key+value projections (one pallas_call per input tensor) ---
    node_key, node_value = dual_linear_stack_2(
        node_inputs, params["node_key"], params["node_value"],
        activation=act, matmul_dtype=matmul_dtype)            # [N, H] f32, [N, H*Fn]
    edge_key, edge_value = dual_linear_stack_2(
        edge_inputs, params["edge_key"], params["edge_value"],
        activation=act, matmul_dtype=matmul_dtype)            # [E, H] f32, [E, H*Fe]

    # torch .view(num_heads, -1, ...) is a row-major reshape of the contiguous
    # 2-D output (NOT a transpose); jnp.reshape matches it exactly.
    node_key = node_key.reshape(h, n_nodes)
    node_value = node_value.reshape(h, n_nodes, node_in_feats)
    edge_key = edge_key.reshape(h, n_edges)
    edge_value = edge_value.reshape(h, n_edges, edge_in_feats)

    # --- self attention (Pallas softmax) ---
    node_self_attention = scaled_softmax(node_key, in_feats=node_in_feats,
                                         approx_recip=approx_recip)          # [H, N]
    edge_self_attention = scaled_softmax(edge_key, in_feats=edge_in_feats,
                                         approx_recip=approx_recip)          # [H, E]

    # --- dense attention projections from the (line-)graph connectivity ---
    # Built directly in matmul_dtype (probabilities are in [0,1]; bf16 halves the
    # dominant H*L*L HBM stream). Accumulation in the message kernel stays f32.
    # TODO(synk): replace this scatter + dense matmul with an SpMM-style kernel
    #             using scalar-prefetched CSR offsets to avoid materializing it.
    node_attention_projection = jnp.zeros((h, n_nodes, n_nodes), matmul_dtype) \
        .at[:, g_src, g_dst].set(edge_self_attention.astype(matmul_dtype))
    connecting_g_nodes = g_dst[lg_src]
    edge_attention_projection = jnp.zeros((h, n_edges, n_edges), matmul_dtype) \
        .at[:, lg_src, lg_dst].set(
            node_self_attention[:, connecting_g_nodes].astype(matmul_dtype))

    # --- message aggregation row scaling (applied in the kernel finalize step) ---
    if message_aggregation_type == "sum":
        node_row_scale = jnp.ones((n_nodes, 1), jnp.float32)
        edge_row_scale = jnp.ones((n_edges, 1), jnp.float32)
    elif message_aggregation_type == "mean":
        node_deg = jnp.zeros((n_nodes,), jnp.float32).at[g_dst].add(1.0)
        edge_deg = jnp.zeros((n_edges,), jnp.float32).at[lg_dst].add(1.0)
        node_row_scale = jnp.where(node_deg > 0, 1.0 / node_deg, 0.0).reshape(n_nodes, 1)
        edge_row_scale = jnp.where(edge_deg > 0, 1.0 / edge_deg, 0.0).reshape(n_edges, 1)
    else:
        # TODO(synk): 'gcn' aggregation (sqrt of inverted dense adjacency) is not implemented.
        raise NotImplementedError(message_aggregation_type)

    # --- per-head message passing + head pooling (row-tiled fused Pallas kernel) ---
    node_message = attention_message_pool(node_attention_projection,
                                          node_value.astype(matmul_dtype),
                                          node_row_scale,
                                          head_pooling_type=head_pooling_type)   # [N, Fn]
    edge_message = attention_message_pool(edge_attention_projection,
                                          edge_value.astype(matmul_dtype),
                                          edge_row_scale,
                                          head_pooling_type=head_pooling_type)   # [E, Fe]
    return node_message, edge_message


# ---------------------------------------------------------------------------
# Parameter init (torch nn.Linear-style uniform bounds) and pure-JAX reference
# ---------------------------------------------------------------------------
def init_params(key, node_in_feats, edge_in_feats, num_heads, projection_factor=4):
    def init_linear(k, in_f, out_f):
        bound = 1.0 / math.sqrt(in_f)
        kw, kb = jax.random.split(k)
        w = jax.random.uniform(kw, (out_f, in_f), minval=-bound, maxval=bound,
                               dtype=jnp.float32)
        b = jax.random.uniform(kb, (out_f,), minval=-bound, maxval=bound,
                               dtype=jnp.float32)
        return w, b

    keys = jax.random.split(key, 8)
    pf = projection_factor
    nk1 = init_linear(keys[0], node_in_feats, num_heads * pf)
    nk2 = init_linear(keys[1], num_heads * pf, num_heads)
    nv1 = init_linear(keys[2], node_in_feats, num_heads * node_in_feats * pf)
    nv2 = init_linear(keys[3], num_heads * node_in_feats * pf, num_heads * node_in_feats)
    ek1 = init_linear(keys[4], edge_in_feats, num_heads * pf)
    ek2 = init_linear(keys[5], num_heads * pf, num_heads)
    ev1 = init_linear(keys[6], edge_in_feats, num_heads * edge_in_feats * pf)
    ev2 = init_linear(keys[7], num_heads * edge_in_feats * pf, num_heads * edge_in_feats)
    return {
        "node_key": (nk1[0], nk1[1], nk2[0], nk2[1]),
        "node_value": (nv1[0], nv1[1], nv2[0], nv2[1]),
        "edge_key": (ek1[0], ek1[1], ek2[0], ek2[1]),
        "edge_value": (ev1[0], ev1[1], ev2[0], ev2[1]),
    }


def reference_forward(params, node_inputs, edge_inputs, g_src, g_dst, lg_src, lg_dst, *,
                      num_heads, node_in_feats, edge_in_feats,
                      message_aggregation_type, head_pooling_type, activation):
    def mlp(x, w1, b1, w2, b2):
        y = _apply_activation(x @ w1.T + b1, activation)
        return _apply_activation(y @ w2.T + b2, activation)

    n, e, h = node_inputs.shape[0], edge_inputs.shape[0], num_heads
    node_key = mlp(node_inputs, *params["node_key"]).reshape(h, n)
    node_value = mlp(node_inputs, *params["node_value"]).reshape(h, n, node_in_feats)
    edge_key = mlp(edge_inputs, *params["edge_key"]).reshape(h, e)
    edge_value = mlp(edge_inputs, *params["edge_value"]).reshape(h, e, edge_in_feats)

    node_attn = jax.nn.softmax(node_key / math.sqrt(node_in_feats), axis=1)
    edge_attn = jax.nn.softmax(edge_key / math.sqrt(edge_in_feats), axis=1)

    node_proj = jnp.zeros((h, n, n), jnp.float32).at[:, g_src, g_dst].set(edge_attn)
    edge_proj = jnp.zeros((h, e, e), jnp.float32) \
        .at[:, lg_src, lg_dst].set(node_attn[:, g_dst[lg_src]])

    if message_aggregation_type == "mean":
        node_deg = jnp.zeros((n,), jnp.float32).at[g_dst].add(1.0)
        edge_deg = jnp.zeros((e,), jnp.float32).at[lg_dst].add(1.0)
        node_proj = node_proj * jnp.where(node_deg > 0, 1.0 / node_deg, 0.0)[None, :, None]
        edge_proj = edge_proj * jnp.where(edge_deg > 0, 1.0 / edge_deg, 0.0)[None, :, None]

    node_msg = jnp.einsum("hnm,hmf->hnf", node_proj, node_value)
    edge_msg = jnp.einsum("hnm,hmf->hnf", edge_proj, edge_value)

    if head_pooling_type == "sum":
        return node_msg.sum(axis=0), edge_msg.sum(axis=0)
    return node_msg.mean(axis=0), edge_msg.mean(axis=0)


# ---------------------------------------------------------------------------
# Demo / correctness check
# ---------------------------------------------------------------------------
if __name__ == "__main__":
    num_nodes = 8
    node_in_feats = 16
    edge_in_feats = 8
    num_heads = 4
    activation = "relu"
    message_aggregation_type = "sum"
    head_pooling_type = "mean"

    # Deterministic small directed graph: ring + second-neighbor chords (no duplicates).
    src_list, dst_list = [], []
    for i in range(num_nodes):
        src_list += [i, i]
        dst_list += [(i + 1) % num_nodes, (i + 2) % num_nodes]
    g_src = jnp.asarray(src_list, dtype=jnp.int32)
    g_dst = jnp.asarray(dst_list, dtype=jnp.int32)
    num_edges = int(g_src.shape[0])                      # 16

    # Directed line graph: edge (a->b) connects to every edge (b->c).
    lg_src_l, lg_dst_l = [], []
    for e1 in range(num_edges):
        for e2 in range(num_edges):
            if dst_list[e1] == src_list[e2]:
                lg_src_l.append(e1)
                lg_dst_l.append(e2)
    lg_src = jnp.asarray(lg_src_l, dtype=jnp.int32)
    lg_dst = jnp.asarray(lg_dst_l, dtype=jnp.int32)

    key = jax.random.PRNGKey(0)
    k_node, k_edge, k_param = jax.random.split(key, 3)
    node_inputs = jax.random.normal(k_node, (num_nodes, node_in_feats), dtype=jnp.float32)
    edge_inputs = jax.random.normal(k_edge, (num_edges, edge_in_feats), dtype=jnp.float32)
    params = init_params(k_param, node_in_feats, edge_in_feats, num_heads)

    common = dict(num_heads=num_heads, node_in_feats=node_in_feats,
                  edge_in_feats=edge_in_feats,
                  message_aggregation_type=message_aggregation_type,
                  head_pooling_type=head_pooling_type,
                  linear_projection_activation=activation)

    # Pure-JAX reference.
    node_ref, edge_ref = reference_forward(
        params, node_inputs, edge_inputs, g_src, g_dst, lg_src, lg_dst,
        num_heads=num_heads, node_in_feats=node_in_feats, edge_in_feats=edge_in_feats,
        message_aggregation_type=message_aggregation_type,
        head_pooling_type=head_pooling_type, activation=activation)

    # 1) f32 path: exact-precision check against the reference.
    node_out, edge_out = mutual_multi_attention_head_forward(
        params, node_inputs, edge_inputs, g_src, g_dst, lg_src, lg_dst,
        matmul_dtype=jnp.float32, approx_recip=False, **common)
    node_out = jax.block_until_ready(node_out)
    edge_out = jax.block_until_ready(edge_out)
    assert node_out.shape == (num_nodes, node_in_feats)
    assert edge_out.shape == (num_edges, edge_in_feats)
    assert jnp.allclose(node_out, node_ref, atol=1e-4, rtol=1e-4), "node output mismatch (f32)"
    assert jnp.allclose(edge_out, edge_ref, atol=1e-4, rtol=1e-4), "edge output mismatch (f32)"

    # 2) bf16 production path: bf16 MXU inputs / bf16 proj+value HBM streams,
    #    f32 accumulation, EUP approx reciprocal in the softmax.
    node_bf, edge_bf = mutual_multi_attention_head_forward(
        params, node_inputs, edge_inputs, g_src, g_dst, lg_src, lg_dst,
        matmul_dtype=jnp.bfloat16, approx_recip=True, **common)
    node_bf = jax.block_until_ready(node_bf)
    edge_bf = jax.block_until_ready(edge_bf)
    assert jnp.allclose(node_bf, node_ref, atol=1e-1, rtol=1e-1), "node output mismatch (bf16)"
    assert jnp.allclose(edge_bf, edge_ref, atol=1e-1, rtol=1e-1), "edge output mismatch (bf16)"

    print("KERNEL_OK")
</pallas_src>

<mosaic_0001>
module attributes {stable_mosaic.version = 11 : i64} {
  func.func @_mlp2_dual_kernel(%arg0: i32, %arg1: memref<8x16xf32, #tpu.memory_space<vmem>>, %arg2: memref<16x16xf32, #tpu.memory_space<vmem>>, %arg3: memref<1x16xf32, #tpu.memory_space<vmem>>, %arg4: memref<16x4xf32, #tpu.memory_space<vmem>>, %arg5: memref<1x4xf32, #tpu.memory_space<vmem>>, %arg6: memref<16x256xf32, #tpu.memory_space<vmem>>, %arg7: memref<1x256xf32, #tpu.memory_space<vmem>>, %arg8: memref<256x64xf32, #tpu.memory_space<vmem>>, %arg9: memref<1x64xf32, #tpu.memory_space<vmem>>, %arg10: memref<8x4xf32, #tpu.memory_space<vmem>>, %arg11: memref<8x64xf32, #tpu.memory_space<vmem>>) attributes {dimension_semantics = [#tpu.dimension_semantics<parallel>], iteration_bounds = array<i64: 1>, scalar_prefetch = 0 : i64, scratch_operands = 0 : i64, tpu.core_type = #tpu.core_type<tc>, window_params = [{transform_indices = @transform_0, window_bounds = array<i64: 8, 16>}, {pipeline_mode = #tpu.pipeline_mode<synchronous>, transform_indices = @transform_1, window_bounds = array<i64: 16, 16>}, {pipeline_mode = #tpu.pipeline_mode<synchronous>, transform_indices = @transform_2, window_bounds = array<i64: 1, 16>}, {pipeline_mode = #tpu.pipeline_mode<synchronous>, transform_indices = @transform_3, window_bounds = array<i64: 16, 4>}, {pipeline_mode = #tpu.pipeline_mode<synchronous>, transform_indices = @transform_4, window_bounds = array<i64: 1, 4>}, {pipeline_mode = #tpu.pipeline_mode<synchronous>, transform_indices = @transform_5, window_bounds = array<i64: 16, 256>}, {pipeline_mode = #tpu.pipeline_mode<synchronous>, transform_indices = @transform_6, window_bounds = array<i64: 1, 256>}, {pipeline_mode = #tpu.pipeline_mode<synchronous>, transform_indices = @transform_7, window_bounds = array<i64: 256, 64>}, {pipeline_mode = #tpu.pipeline_mode<synchronous>, transform_indices = @transform_8, window_bounds = array<i64: 1, 64>}, {transform_indices = @transform_9, window_bounds = array<i64: 8, 4>}, {transform_indices = @transform_10, window_bounds = array<i64: 8, 64>}]} {
    %c0 = arith.constant 0 : index
    %c0_0 = arith.constant 0 : index
    %0 = vector.load %arg1[%c0, %c0_0] : memref<8x16xf32, #tpu.memory_space<vmem>>, vector<8x16xf32>
    %c0_1 = arith.constant 0 : index
    %c0_2 = arith.constant 0 : index
    %1 = vector.load %arg2[%c0_1, %c0_2] : memref<16x16xf32, #tpu.memory_space<vmem>>, vector<16x16xf32>
    %cst = arith.constant dense<0.000000e+00> : vector<8x16xf32>
    %2 = tpu.matmul %0, %1, %cst {dimension_numbers = #tpu.dot_dimension_numbers<[1], [0], [0], [1], [0, 0, 1, 1], [], []>} : vector<8x16xf32>, vector<16x16xf32>, vector<8x16xf32> -> vector<8x16xf32>
    %c0_3 = arith.constant 0 : index
    %c0_4 = arith.constant 0 : index
    %3 = vector.load %arg3[%c0_3, %c0_4] : memref<1x16xf32, #tpu.memory_space<vmem>>, vector<1x16xf32>
    %4 = vector.broadcast %3 : vector<1x16xf32> to vector<8x16xf32>
    %5 = arith.addf %2, %4 : vector<8x16xf32>
    %cst_5 = arith.constant 0.000000e+00 : f32
    %6 = vector.broadcast %cst_5 : f32 to vector<8x16xf32>
    %7 = arith.maximumf %5, %6 : vector<8x16xf32>
    %c0_6 = arith.constant 0 : index
    %c0_7 = arith.constant 0 : index
    %8 = vector.load %arg4[%c0_6, %c0_7] : memref<16x4xf32, #tpu.memory_space<vmem>>, vector<16x4xf32>
    %cst_8 = arith.constant dense<0.000000e+00> : vector<8x4xf32>
    %9 = tpu.matmul %7, %8, %cst_8 {dimension_numbers = #tpu.dot_dimension_numbers<[1], [0], [0], [1], [0, 0, 1, 1], [], []>} : vector<8x16xf32>, vector<16x4xf32>, vector<8x4xf32> -> vector<8x4xf32>
    %c0_9 = arith.constant 0 : index
    %c0_10 = arith.constant 0 : index
    %10 = vector.load %arg5[%c0_9, %c0_10] : memref<1x4xf32, #tpu.memory_space<vmem>>, vector<1x4xf32>
    %11 = vector.broadcast %10 : vector<1x4xf32> to vector<8x4xf32>
    %12 = arith.addf %9, %11 : vector<8x4xf32>
    %cst_11 = arith.constant 0.000000e+00 : f32
    %13 = vector.broadcast %cst_11 : f32 to vector<8x4xf32>
    %14 = arith.maximumf %12, %13 : vector<8x4xf32>
    %c0_12 = arith.constant 0 : index
    %c0_13 = arith.constant 0 : index
    %15 = vector.load %arg10[%c0_12, %c0_13] : memref<8x4xf32, #tpu.memory_space<vmem>>, vector<8x4xf32>
    tpu.vector_store %arg10[%c0_12, %c0_13], %14 {strides = array<i32>} : memref<8x4xf32, #tpu.memory_space<vmem>>, vector<8x4xf32>,
    %c0_14 = arith.constant 0 : index
    %c0_15 = arith.constant 0 : index
    %16 = vector.load %arg6[%c0_14, %c0_15] : memref<16x256xf32, #tpu.memory_space<vmem>>, vector<16x256xf32>
    %cst_16 = arith.constant dense<0.000000e+00> : vector<8x256xf32>
    %17 = tpu.matmul %0, %16, %cst_16 {dimension_numbers = #tpu.dot_dimension_numbers<[1], [0], [0], [1], [0, 0, 1, 1], [], []>} : vector<8x16xf32>, vector<16x256xf32>, vector<8x256xf32> -> vector<8x256xf32>
    %c0_17 = arith.constant 0 : index
    %c0_18 = arith.constant 0 : index
    %18 = vector.load %arg7[%c0_17, %c0_18] : memref<1x256xf32, #tpu.memory_space<vmem>>, vector<1x256xf32>
    %19 = vector.broadcast %18 : vector<1x256xf32> to vector<8x256xf32>
    %20 = arith.addf %17, %19 : vector<8x256xf32>
    %cst_19 = arith.constant 0.000000e+00 : f32
    %21 = vector.broadcast %cst_19 : f32 to vector<8x256xf32>
    %22 = arith.maximumf %20, %21 : vector<8x256xf32>
    %c0_20 = arith.constant 0 : index
    %c0_21 = arith.constant 0 : index
    %23 = vector.load %arg8[%c0_20, %c0_21] : memref<256x64xf32, #tpu.memory_space<vmem>>, vector<256x64xf32>
    %cst_22 = arith.constant dense<0.000000e+00> : vector<8x64xf32>
    %24 = tpu.matmul %22, %23, %cst_22 {dimension_numbers = #tpu.dot_dimension_numbers<[1], [0], [0], [1], [0, 0, 1, 1], [], []>} : vector<8x256xf32>, vector<256x64xf32>, vector<8x64xf32> -> vector<8x64xf32>
    %c0_23 = arith.constant 0 : index
    %c0_24 = arith.constant 0 : index
    %25 = vector.load %arg9[%c0_23, %c0_24] : memref<1x64xf32, #tpu.memory_space<vmem>>, vector<1x64xf32>
    %26 = vector.broadcast %25 : vector<1x64xf32> to vector<8x64xf32>
    %27 = arith.addf %24, %26 : vector<8x64xf32>
    %cst_25 = arith.constant 0.000000e+00 : f32
    %28 = vector.broadcast %cst_25 : f32 to vector<8x64xf32>
    %29 = arith.maximumf %27, %28 : vector<8x64xf32>
    %c0_26 = arith.constant 0 : index
    %c0_27 = arith.constant 0 : index
    %30 = vector.load %arg11[%c0_26, %c0_27] : memref<8x64xf32, #tpu.memory_space<vmem>>, vector<8x64xf32>
    tpu.vector_store %arg11[%c0_26, %c0_27], %29 {strides = array<i32>} : memref<8x64xf32, #tpu.memory_space<vmem>>, vector<8x64xf32>,
    return
  }
  func.func @transform_0(%arg0: i32) -> (i32, i32) {
    %c0_i32 = arith.constant 0 : i32
    %c0_i32_0 = arith.constant 0 : i32
    return %arg0, %c0_i32 : i32, i32
  }
  func.func @transform_1(%arg0: i32) -> (i32, i32) {
    %c0_i32 = arith.constant 0 : i32
    %c0_i32_0 = arith.constant 0 : i32
    %c0_i32_1 = arith.constant 0 : i32
    return %c0_i32, %c0_i32_0 : i32, i32
  }
  func.func @transform_2(%arg0: i32) -> (i32, i32) {
    %c0_i32 = arith.constant 0 : i32
    %c0_i32_0 = arith.constant 0 : i32
    %c0_i32_1 = arith.constant 0 : i32
    return %c0_i32, %c0_i32_0 : i32, i32
  }
  func.func @transform_3(%arg0: i32) -> (i32, i32) {
    %c0_i32 = arith.constant 0 : i32
    %c0_i32_0 = arith.constant 0 : i32
    %c0_i32_1 = arith.constant 0 : i32
    return %c0_i32, %c0_i32_0 : i32, i32
  }
  func.func @transform_4(%arg0: i32) -> (i32, i32) {
    %c0_i32 = arith.constant 0 : i32
    %c0_i32_0 = arith.constant 0 : i32
    %c0_i32_1 = arith.constant 0 : i32
    return %c0_i32, %c0_i32_0 : i32, i32
  }
  func.func @transform_5(%arg0: i32) -> (i32, i32) {
    %c0_i32 = arith.constant 0 : i32
    %c0_i32_0 = arith.constant 0 : i32
    %c0_i32_1 = arith.constant 0 : i32
    return %c0_i32, %c0_i32_0 : i32, i32
  }
  func.func @transform_6(%arg0: i32) -> (i32, i32) {
    %c0_i32 = arith.constant 0 : i32
    %c0_i32_0 = arith.constant 0 : i32
    %c0_i32_1 = arith.constant 0 : i32
    return %c0_i32, %c0_i32_0 : i32, i32
  }
  func.func @transform_7(%arg0: i32) -> (i32, i32) {
    %c0_i32 = arith.constant 0 : i32
    %c0_i32_0 = arith.constant 0 : i32
    %c0_i32_1 = arith.constant 0 : i32
    return %c0_i32, %c0_i32_0 : i32, i32
  }
  func.func @transform_8(%arg0: i32) -> (i32, i32) {
    %c0_i32 = arith.constant 0 : i32
    %c0_i32_0 = arith.constant 0 : i32
    %c0_i32_1 = arith.constant 0 : i32
    return %c0_i32, %c0_i32_0 : i32, i32
  }
  func.func @transform_9(%arg0: i32) -> (i32, i32) {
    %c0_i32 = arith.constant 0 : i32
    %c0_i32_0 = arith.constant 0 : i32
    return %arg0, %c0_i32 : i32, i32
  }
  func.func @transform_10(%arg0: i32) -> (i32, i32) {
    %c0_i32 = arith.constant 0 : i32
    %c0_i32_0 = arith.constant 0 : i32
    return %arg0, %c0_i32 : i32, i32
  }
}

</mosaic_0001>

<llo_original>
// kernel: tpu_custom_call.1
$region0: #{tpu_custom_call.1}
  #allocation0 [shape = 'u32[]', space=smem, size = 0x4, offset = 0x4, fixed_abs, tag = 'smem constant byte address 0x4 - core index']
  #allocation1 [shape = 'u32[144,128]{1,0:T(1,128)}', space=vmem, size = 0x12000, scoped, tag = 'internal scratch']
  %s0 = inlined_call_operand.vmem [shape: f32[8,16], index: 0, kind: input, shape index: {}]
  %s1 = inlined_call_operand.vmem [shape: f32[16,16], index: 1, kind: input, shape index: {}]
  %s2 = inlined_call_operand.vmem [shape: f32[1,16], index: 2, kind: input, shape index: {}]
  %s3 = inlined_call_operand.vmem [shape: f32[16,4], index: 3, kind: input, shape index: {}]
  %s4 = inlined_call_operand.vmem [shape: f32[1,4], index: 4, kind: input, shape index: {}]
  %s5 = inlined_call_operand.vmem [shape: f32[16,256], index: 5, kind: input, shape index: {}]
  %s6 = inlined_call_operand.vmem [shape: f32[1,256], index: 6, kind: input, shape index: {}]
  %s7 = inlined_call_operand.vmem [shape: f32[256,64], index: 7, kind: input, shape index: {}]
  %s8 = inlined_call_operand.vmem [shape: f32[1,64], index: 8, kind: input, shape index: {}]
  %s9 = inlined_call_operand.vmem [shape: f32[8,4], index: 9, kind: output, shape index: {0}]
  %s10 = inlined_call_operand.hbm [shape: f32[8,64], index: 10, kind: output, shape index: {1}]
  %11 = xla_tuple %s9, %s10
  %s12 = sld [smem:[#allocation0]]
  $region54: #{tpu_custom_call.1} parent=0
    _
  %s14 = ssub.s32 1, %s12
  %s15 = scalar_select 0, %s14, %s12
  $region1: #{tpu_custom_call.1} parent=0
    #allocation2 [shape = 'u8[4096]{0}', space=vmem, size = 0x1000, scoped, tag = 'output window, operand 1, single buffered']
    #allocation3 [shape = 's32[1]{0}', space=sflag, size = 0x4, scoped, tag = 'scoped memory for tpu_custom_call.1']
    %16 = vsyncpa [#allocation3], 0
    // Predicated region
    $region2: #{tpu_custom_call.1} parent=1 // pred_check
      _
    $region3: #{tpu_custom_call.1} parent=1 // pred_check_branch
      %18 = sbr.rel (0) target = $region5
    $region4: #{tpu_custom_call.1} parent=1 // pred_region
      _
    $region5: #{tpu_custom_call.1} parent=1 // pred_fallthru
      _
    // Predicated region
    $region6: #{tpu_custom_call.1} parent=1 // pred_check
      _
    $region7: #{tpu_custom_call.1} parent=1 // pred_check_branch
      %20 = sbr.rel (0) target = $region9
    $region8: #{tpu_custom_call.1} parent=1 // pred_region
      _
    $region9: #{tpu_custom_call.1} parent=1 // pred_fallthru
      _
    // Predicated region
    $region10: #{tpu_custom_call.1} parent=1 // pred_check
      _
    $region11: #{tpu_custom_call.1} parent=1 // pred_check_branch
      %22 = sbr.rel (0) target = $region13
    $region12: #{tpu_custom_call.1} parent=1 // pred_region
      _
    $region13: #{tpu_custom_call.1} parent=1 // pred_fallthru
      _
    // Predicated region
    $region14: #{tpu_custom_call.1} parent=1 // pred_check
      _
    $region15: #{tpu_custom_call.1} parent=1 // pred_check_branch
      %24 = sbr.rel (0) target = $region17
    $region16: #{tpu_custom_call.1} parent=1 // pred_region
      _
    $region17: #{tpu_custom_call.1} parent=1 // pred_fallthru
      _
    // Predicated region
    $region18: #{tpu_custom_call.1} parent=1 // pred_check
      _
    $region19: #{tpu_custom_call.1} parent=1 // pred_check_branch
      %26 = sbr.rel (0) target = $region21
    $region20: #{tpu_custom_call.1} parent=1 // pred_region
      _
    $region21: #{tpu_custom_call.1} parent=1 // pred_fallthru
      _
    // Predicated region
    $region22: #{tpu_custom_call.1} parent=1 // pred_check
      _
    $region23: #{tpu_custom_call.1} parent=1 // pred_check_branch
      %28 = sbr.rel (0) target = $region25
    $region24: #{tpu_custom_call.1} parent=1 // pred_region
      _
    $region25: #{tpu_custom_call.1} parent=1 // pred_fallthru
      _
    // Predicated region
    $region26: #{tpu_custom_call.1} parent=1 // pred_check
      _
    $region27: #{tpu_custom_call.1} parent=1 // pred_check_branch
      %30 = sbr.rel (0) target = $region29
    $region28: #{tpu_custom_call.1} parent=1 // pred_region
      _
    $region29: #{tpu_custom_call.1} parent=1 // pred_fallthru
      _
    // Predicated region
    $region30: #{tpu_custom_call.1} parent=1 // pred_check
      _
    $region31: #{tpu_custom_call.1} parent=1 // pred_check_branch
      %32 = sbr.rel (0) target = $region33
    $region32: #{tpu_custom_call.1} parent=1 // pred_region
      _
    $region33: #{tpu_custom_call.1} parent=1 // pred_fallthru
      _
    // Predicated region
    $region34: #{tpu_custom_call.1} parent=1 // pred_check
      _
    $region35: #{tpu_custom_call.1} parent=1 // pred_check_branch
      %34 = sbr.rel (0) target = $region37
    $region36: #{tpu_custom_call.1} parent=1 // pred_region
      _
    $region37: #{tpu_custom_call.1} parent=1 // pred_fallthru
      _
    %v35 = vld [vmem:[%s0] sm:$0xff]
    %v36 = vld [vmem:[%s1] sm:$0xff]
    %v37 = vld [vmem:[%s1 + $0x8] sm:$0xff]
    %v38 = vld [vmem:[%s2] sm:$0x1]
    %v40 = vlaneseq
    %v41 = vshrl.u32 %v40, 7
    %v42 = vsub.s32 0, %v41
    %v43 = vrot.slane %v38, %v42
    %vm45 = vcmask 130048
    %v47 = vsel %vm45, %v35, 0
    %49 = vmatprep.subr.mxu0 0.0
    %50 = vmatpush1.msra.mxu0 %v36
    %51 = vmatprep.subr.mxu0 0.0
    %52 = vmatpush1.msra.mxu0 %v37
    %53 = vmatprep.subr.mxu0 0.0
    %54 = vmatpush1.msra.mxu0 0.0
    %55 = vmatprep.subr.mxu0 0.0
    %56 = vmatpush1.msra.mxu0 0.0
    %57 = vmatprep.subr.mxu0 0.0
    %58 = vmatpush1.msra.mxu0 0.0
    %59 = vmatprep.subr.mxu0 0.0
    %60 = vmatpush1.msra.mxu0 0.0
    %61 = vmatprep.subr.mxu0 0.0
    %62 = vmatpush1.msra.mxu0 0.0
    %63 = vmatprep.subr.mxu0 0.0
    %64 = vmatpush1.msra.mxu0 0.0
    %65 = vmatprep.subr.mxu0 0.0
    %66 = vmatpush1.msra.mxu0 0.0
    %67 = vmatprep.subr.mxu0 0.0
    %68 = vmatpush1.msra.mxu0 0.0
    %69 = vmatprep.subr.mxu0 0.0
    %70 = vmatpush1.msra.mxu0 0.0
    %71 = vmatprep.subr.mxu0 0.0
    %72 = vmatpush1.msra.mxu0 0.0
    %73 = vmatprep.subr.mxu0 0.0
    %74 = vmatpush1.msra.mxu0 0.0
    %75 = vmatprep.subr.mxu0 0.0
    %76 = vmatpush1.msra.mxu0 0.0
    %77 = vmatprep.subr.mxu0 0.0
    %78 = vmatpush1.msra.mxu0 0.0
    %79 = vmatprep.subr.mxu0 0.0
    %80 = vmatpush1.msra.mxu0 0.0
    %81 = vmatprep.subr.mxu0 0.0
    %82 = vmatpush1.msra.mxu0 0.0
    %83 = vmatprep.subr.mxu0 0.0
    %84 = vmatpush1.msra.mxu0 0.0
    %85 = vmatprep.subr.mxu0 0.0
    %86 = vmatpush1.msra.mxu0 0.0
    %87 = vmatprep.subr.mxu0 0.0
    %88 = vmatpush1.msra.mxu0 0.0
    %89 = vmatprep.subr.mxu0 0.0
    %90 = vmatpush1.msra.mxu0 0.0
    %91 = vmatprep.subr.mxu0 0.0
    %92 = vmatpush1.msra.mxu0 0.0
    %93 = vmatprep.subr.mxu0 0.0
    %94 = vmatpush1.msra.mxu0 0.0
    %95 = vmatprep.subr.mxu0 0.0
    %96 = vmatpush1.msra.mxu0 0.0
    %97 = vmatprep.subr.mxu0 0.0
    %98 = vmatpush1.msra.mxu0 0.0
    %99 = vmatprep.subr.mxu0 0.0
    %100 = vmatpush1.msra.mxu0 0.0
    %101 = vmatprep.subr.mxu0 0.0
    %102 = vmatpush1.msra.mxu0 0.0
    %103 = vmatprep.subr.mxu0 0.0
    %104 = vmatpush1.msra.mxu0 0.0
    %105 = vmatprep.subr.mxu0 0.0
    %106 = vmatpush1.msra.mxu0 0.0
    %107 = vmatprep.subr.mxu0 0.0
    %108 = vmatpush1.msra.mxu0 0.0
    %109 = vmatprep.subr.mxu0 0.0
    %110 = vmatpush1.msra.mxu0 0.0
    %111 = vmatprep.subr.mxu0 0.0
    %112 = vmatpush1.msra.mxu0 0.0
    %113 = vmatprep.mubr.f32.mxu0 0.0
    %114 = vmatmul.mubr.f32.gmra.mrb[0].mxu0 %v47
    %v115 = vpop.f32.mrb[0].mxu0
    %v116 = vadd.f32 %v43, %v115
    %v117 = vpop.f32.mrb[0].mxu0
    %118 = vdwg.mxu0
    %v119 = vmax.f32 %v116, 0.0
    %v120 = vld [vmem:[%s3] sm:$0xff]
    %v121 = vld [vmem:[%s3 + $0x8] sm:$0xff]
    %v122 = vld [vmem:[%s4] sm:$0x1]
    %v124 = vlaneseq
    %v125 = vshrl.u32 %v124, 7
    %v126 = vsub.s32 0, %v125
    %v127 = vrot.slane %v122, %v126
    %v130 = vsel %vm45, %v119, 0
    %132 = vmatprep.subr.mxu0 0.0
    %133 = vmatpush1.msra.mxu0 %v120
    %134 = vmatprep.subr.mxu0 0.0
    %135 = vmatpush1.msra.mxu0 %v121
    %136 = vmatprep.subr.mxu0 0.0
    %137 = vmatpush1.msra.mxu0 0.0
    %138 = vmatprep.subr.mxu0 0.0
    %139 = vmatpush1.msra.mxu0 0.0
    %140 = vmatprep.subr.mxu0 0.0
    %141 = vmatpush1.msra.mxu0 0.0
    %142 = vmatprep.subr.mxu0 0.0
    %143 = vmatpush1.msra.mxu0 0.0
    %144 = vmatprep.subr.mxu0 0.0
    %145 = vmatpush1.msra.mxu0 0.0
    %146 = vmatprep.subr.mxu0 0.0
    %147 = vmatpush1.msra.mxu0 0.0
    %148 = vmatprep.subr.mxu0 0.0
    %149 = vmatpush1.msra.mxu0 0.0
    %150 = vmatprep.subr.mxu0 0.0
    %151 = vmatpush1.msra.mxu0 0.0
    %152 = vmatprep.subr.mxu0 0.0
    %153 = vmatpush1.msra.mxu0 0.0
    %154 = vmatprep.subr.mxu0 0.0
    %155 = vmatpush1.msra.mxu0 0.0
    %156 = vmatprep.subr.mxu0 0.0
    %157 = vmatpush1.msra.mxu0 0.0
    %158 = vmatprep.subr.mxu0 0.0
    %159 = vmatpush1.msra.mxu0 0.0
    %160 = vmatprep.subr.mxu0 0.0
    %161 = vmatpush1.msra.mxu0 0.0
    %162 = vmatprep.subr.mxu0 0.0
    %163 = vmatpush1.msra.mxu0 0.0
    %164 = vmatprep.subr.mxu0 0.0
    %165 = vmatpush1.msra.mxu0 0.0
    %166 = vmatprep.subr.mxu0 0.0
    %167 = vmatpush1.msra.mxu0 0.0
    %168 = vmatprep.subr.mxu0 0.0
    %169 = vmatpush1.msra.mxu0 0.0
    %170 = vmatprep.subr.mxu0 0.0
    %171 = vmatpush1.msra.mxu0 0.0
    %172 = vmatprep.subr.mxu0 0.0
    %173 = vmatpush1.msra.mxu0 0.0
    %174 = vmatprep.subr.mxu0 0.0
    %175 = vmatpush1.msra.mxu0 0.0
    %176 = vmatprep.subr.mxu0 0.0
    %177 = vmatpush1.msra.mxu0 0.0
    %178 = vmatprep.subr.mxu0 0.0
    %179 = vmatpush1.msra.mxu0 0.0
    %180 = vmatprep.subr.mxu0 0.0
    %181 = vmatpush1.msra.mxu0 0.0
    %182 = vmatprep.subr.mxu0 0.0
    %183 = vmatpush1.msra.mxu0 0.0
    %184 = vmatprep.subr.mxu0 0.0
    %185 = vmatpush1.msra.mxu0 0.0
    %186 = vmatprep.subr.mxu0 0.0
    %187 = vmatpush1.msra.mxu0 0.0
    %188 = vmatprep.subr.mxu0 0.0
    %189 = vmatpush1.msra.mxu0 0.0
    %190 = vmatprep.subr.mxu0 0.0
    %191 = vmatpush1.msra.mxu0 0.0
    %192 = vmatprep.subr.mxu0 0.0
    %193 = vmatpush1.msra.mxu0 0.0
    %194 = vmatprep.subr.mxu0 0.0
    %195 = vmatpush1.msra.mxu0 0.0
    %196 = vmatprep.mubr.f32.mxu0 0.0
    %197 = vmatmul.mubr.f32.gmra.mrb[0].mxu0 %v130
    %v198 = vpop.f32.mrb[0].mxu0
    %v199 = vadd.f32 %v127, %v198
    %v200 = vpop.f32.mrb[0].mxu0
    %201 = vdwg.mxu0
    %v202 = vmax.f32 %v199, 0.0
    %vm203 = vcmask 31744
    %204 = vst.msk [vmem:[%s9] sm:$0xff] %vm203, %v202
    %v205 = vld [vmem:[%s5] sm:$0xff]
    %v206 = vld [vmem:[%s5 + $0x8] sm:$0xff]
    %v207 = vld [vmem:[%s5 + $0x10] sm:$0xff]
    %v208 = vld [vmem:[%s5 + $0x18] sm:$0xff]
    %v209 = vld [vmem:[%s6] sm:$0x3]
    %v211 = vlaneseq
    %v212 = vshrl.u32 %v211, 7
    %v213 = vsub.s32 0, %v212
    %v214 = vrot.slane %v209, %v213
    %v215 = vlaneseq
    %v216 = vshrl.u32 %v215, 7
    %v217 = vsub.s32 1, %v216
    %v218 = vrot.slane %v209, %v217
    %221 = vmatprep.subr.mxu0 %v206
    %222 = vmatpush1.msra.mxu0 %v205
    %223 = vmatprep.subr.mxu0 %v208
    %224 = vmatpush1.msra.mxu0 %v207
    %225 = vmatprep.subr.mxu0 0.0
    %226 = vmatpush1.msra.mxu0 0.0
    %227 = vmatprep.subr.mxu0 0.0
    %228 = vmatpush1.msra.mxu0 0.0
    %229 = vmatprep.subr.mxu0 0.0
    %230 = vmatpush1.msra.mxu0 0.0
    %231 = vmatprep.subr.mxu0 0.0
    %232 = vmatpush1.msra.mxu0 0.0
    %233 = vmatprep.subr.mxu0 0.0
    %234 = vmatpush1.msra.mxu0 0.0
    %235 = vmatprep.subr.mxu0 0.0
    %236 = vmatpush1.msra.mxu0 0.0
    %237 = vmatprep.subr.mxu0 0.0
    %238 = vmatpush1.msra.mxu0 0.0
    %239 = vmatprep.subr.mxu0 0.0
    %240 = vmatpush1.msra.mxu0 0.0
    %241 = vmatprep.subr.mxu0 0.0
    %242 = vmatpush1.msra.mxu0 0.0
    %243 = vmatprep.subr.mxu0 0.0
    %244 = vmatpush1.msra.mxu0 0.0
    %245 = vmatprep.subr.mxu0 0.0
    %246 = vmatpush1.msra.mxu0 0.0
    %247 = vmatprep.subr.mxu0 0.0
    %248 = vmatpush1.msra.mxu0 0.0
    %249 = vmatprep.subr.mxu0 0.0
    %250 = vmatpush1.msra.mxu0 0.0
    %251 = vmatprep.subr.mxu0 0.0
    %252 = vmatpush1.msra.mxu0 0.0
    %253 = vmatprep.subr.mxu0 0.0
    %254 = vmatpush1.msra.mxu0 0.0
    %255 = vmatprep.subr.mxu0 0.0
    %256 = vmatpush1.msra.mxu0 0.0
    %257 = vmatprep.subr.mxu0 0.0
    %258 = vmatpush1.msra.mxu0 0.0
    %259 = vmatprep.subr.mxu0 0.0
    %260 = vmatpush1.msra.mxu0 0.0
    %261 = vmatprep.subr.mxu0 0.0
    %262 = vmatpush1.msra.mxu0 0.0
    %263 = vmatprep.subr.mxu0 0.0
    %264 = vmatpush1.msra.mxu0 0.0
    %265 = vmatprep.subr.mxu0 0.0
    %266 = vmatpush1.msra.mxu0 0.0
    %267 = vmatprep.subr.mxu0 0.0
    %268 = vmatpush1.msra.mxu0 0.0
    %269 = vmatprep.subr.mxu0 0.0
    %270 = vmatpush1.msra.mxu0 0.0
    %271 = vmatprep.subr.mxu0 0.0
    %272 = vmatpush1.msra.mxu0 0.0
    %273 = vmatprep.subr.mxu0 0.0
    %274 = vmatpush1.msra.mxu0 0.0
    %275 = vmatprep.subr.mxu0 0.0
    %276 = vmatpush1.msra.mxu0 0.0
    %277 = vmatprep.subr.mxu0 0.0
    %278 = vmatpush1.msra.mxu0 0.0
    %279 = vmatprep.subr.mxu0 0.0
    %280 = vmatpush1.msra.mxu0 0.0
    %281 = vmatprep.subr.mxu0 0.0
    %282 = vmatpush1.msra.mxu0 0.0
    %283 = vmatprep.subr.mxu0 0.0
    %284 = vmatpush1.msra.mxu0 0.0
    %285 = vmatprep.mubr.f32.mxu0 0.0
    %286 = vmatmul.mubr.f32.gmra.mrb[0].mxu0 %v47
    %v287 = vpop.f32.mrb[0].mxu0
    %v288 = vadd.f32 %v214, %v287
    %v289 = vpop.f32.mrb[0].mxu0
    %v290 = vadd.f32 %v218, %v289
    %291 = vdwg.mxu0
    %v292 = vmax.f32 %v288, 0.0
    %v293 = vmax.f32 %v290, 0.0
    %v294 = vld [vmem:[%s7] sm:$0xff]
    %v295 = vld [vmem:[%s7 + $0x8] sm:$0xff]
    %v296 = vld [vmem:[%s7 + $0x10] sm:$0xff]
    %v297 = vld [vmem:[%s7 + $0x18] sm:$0xff]
    %v298 = vld [vmem:[%s7 + $0x20] sm:$0xff]
    %v299 = vld [vmem:[%s7 + $0x28] sm:$0xff]
    %v300 = vld [vmem:[%s7 + $0x30] sm:$0xff]
    %v301 = vld [vmem:[%s7 + $0x38] sm:$0xff]
    %v302 = vld [vmem:[%s7 + $0x40] sm:$0xff]
    %v303 = vld [vmem:[%s7 + $0x48] sm:$0xff]
    %v304 = vld [vmem:[%s7 + $0x50] sm:$0xff]
    %v305 = vld [vmem:[%s7 + $0x58] sm:$0xff]
    %v306 = vld [vmem:[%s7 + $0x60] sm:$0xff]
    %v307 = vld [vmem:[%s7 + $0x68] sm:$0xff]
    %v308 = vld [vmem:[%s7 + $0x70] sm:$0xff]
    %v309 = vld [vmem:[%s7 + $0x78] sm:$0xff]
    %v310 = vld [vmem:[%s7 + $0x80] sm:$0xff]
    %v311 = vld [vmem:[%s7 + $0x88] sm:$0xff]
    %v312 = vld [vmem:[%s7 + $0x90] sm:$0xff]
    %v313 = vld [vmem:[%s7 + $0x98] sm:$0xff]
    %v314 = vld [vmem:[%s7 + $0xa0] sm:$0xff]
    %v315 = vld [vmem:[%s7 + $0xa8] sm:$0xff]
    %v316 = vld [vmem:[%s7 + $0xb0] sm:$0xff]
    %v317 = vld [vmem:[%s7 + $0xb8] sm:$0xff]
    %v318 = vld [vmem:[%s7 + $0xc0] sm:$0xff]
    %v319 = vld [vmem:[%s7 + $0xc8] sm:$0xff]
    %v320 = vld [vmem:[%s7 + $0xd0] sm:$0xff]
    %v321 = vld [vmem:[%s7 + $0xd8] sm:$0xff]
    %v322 = vld [vmem:[%s7 + $0xe0] sm:$0xff]
    %v323 = vld [vmem:[%s7 + $0xe8] sm:$0xff]
    %v324 = vld [vmem:[%s7 + $0xf0] sm:$0xff]
    %v325 = vld [vmem:[%s7 + $0xf8] sm:$0xff]
    %v326 = vld [vmem:[%s8] sm:$0x1]
    %v328 = vlaneseq
    %v329 = vshrl.u32 %v328, 7
    %v330 = vsub.s32 0, %v329
    %v331 = vrot.slane %v326, %v330
    %333 = vmatprep.subr.mxu0 0.0
    %334 = vmatpush1.msra.mxu0 %v294
    %335 = vmatprep.subr.mxu0 0.0
    %336 = vmatpush1.msra.mxu0 %v295
    %337 = vmatprep.subr.mxu0 0.0
    %338 = vmatpush1.msra.mxu0 %v296
    %339 = vmatprep.subr.mxu0 0.0
    %340 = vmatpush1.msra.mxu0 %v297
    %341 = vmatprep.subr.mxu0 0.0
    %342 = vmatpush1.msra.mxu0 %v298
    %343 = vmatprep.subr.mxu0 0.0
    %344 = vmatpush1.msra.mxu0 %v299
    %345 = vmatprep.subr.mxu0 0.0
    %346 = vmatpush1.msra.mxu0 %v300
    %347 = vmatprep.subr.mxu0 0.0
    %348 = vmatpush1.msra.mxu0 %v301
    %349 = vmatprep.subr.mxu0 0.0
    %350 = vmatpush1.msra.mxu0 %v302
    %351 = vmatprep.subr.mxu0 0.0
    %352 = vmatpush1.msra.mxu0 %v303
    %353 = vmatprep.subr.mxu0 0.0
    %354 = vmatpush1.msra.mxu0 %v304
    %355 = vmatprep.subr.mxu0 0.0
    %356 = vmatpush1.msra.mxu0 %v305
    %357 = vmatprep.subr.mxu0 0.0
    %358 = vmatpush1.msra.mxu0 %v306
    %359 = vmatprep.subr.mxu0 0.0
    %360 = vmatpush1.msra.mxu0 %v307
    %361 = vmatprep.subr.mxu0 0.0
    %362 = vmatpush1.msra.mxu0 %v308
    %363 = vmatprep.subr.mxu0 0.0
    %364 = vmatpush1.msra.mxu0 %v309
    %365 = vmatprep.subr.mxu0 0.0
    %366 = vmatpush1.msra.mxu0 %v310
    %367 = vmatprep.subr.mxu0 0.0
    %368 = vmatpush1.msra.mxu0 %v311
    %369 = vmatprep.subr.mxu0 0.0
    %370 = vmatpush1.msra.mxu0 %v312
    %371 = vmatprep.subr.mxu0 0.0
    %372 = vmatpush1.msra.mxu0 %v313
    %373 = vmatprep.subr.mxu0 0.0
    %374 = vmatpush1.msra.mxu0 %v314
    %375 = vmatprep.subr.mxu0 0.0
    %376 = vmatpush1.msra.mxu0 %v315
    %377 = vmatprep.subr.mxu0 0.0
    %378 = vmatpush1.msra.mxu0 %v316
    %379 = vmatprep.subr.mxu0 0.0
    %380 = vmatpush1.msra.mxu0 %v317
    %381 = vmatprep.subr.mxu0 0.0
    %382 = vmatpush1.msra.mxu0 %v318
    %383 = vmatprep.subr.mxu0 0.0
    %384 = vmatpush1.msra.mxu0 %v319
    %385 = vmatprep.subr.mxu0 0.0
    %386 = vmatpush1.msra.mxu0 %v320
    %387 = vmatprep.subr.mxu0 0.0
    %388 = vmatpush1.msra.mxu0 %v321
    %389 = vmatprep.subr.mxu0 0.0
    %390 = vmatpush1.msra.mxu0 %v322
    %391 = vmatprep.subr.mxu0 0.0
    %392 = vmatpush1.msra.mxu0 %v323
    %393 = vmatprep.subr.mxu0 0.0
    %394 = vmatpush1.msra.mxu0 %v324
    %395 = vmatprep.subr.mxu0 0.0
    %396 = vmatpush1.msra.mxu0 %v325
    %397 = vmatprep.mubr.f32.mxu0 %v293
    %398 = vmatmul.mubr.f32.gmra.mrb[0].mxu0 %v292
    %v399 = vpop.f32.mrb[0].mxu0
    %v400 = vadd.f32 %v331, %v399
    %v401 = vpop.f32.mrb[0].mxu0
    %402 = vdwg.mxu0
    %v403 = vmax.f32 %v400, 0.0
    %vm404 = vcmask 523264
    %405 = vst.msk [vmem:[#allocation2] sm:$0xff] %vm404, %v403
    // Predicated region
    $region38: #{tpu_custom_call.1} parent=1 // pred_check
      _
    $region39: #{tpu_custom_call.1} parent=1 // pred_check_branch
      %407 = sbr.rel (0) target = $region41
    $region40: #{tpu_custom_call.1} parent=1 // pred_region
      _
    $region41: #{tpu_custom_call.1} parent=1 // pred_fallthru
      _
    // Predicated region
    $region42: #{tpu_custom_call.1} parent=1 // pred_check
      _
    $region43: #{tpu_custom_call.1} parent=1 // pred_check_branch
      %409 = sbr.rel (0) target = $region45
    $region44: #{tpu_custom_call.1} parent=1 // pred_region
      %s411 = ssub.s32 128, 128
      %412 = vsyncadd [#allocation3], %s411
      %s414 = sshll.u32 [#allocation2], 4
      %s415 = int_to_ptr.vmem [resolvable:$true] %s414
      %417 = dma.vmem_to_hbm [thread:$0]  %s415, 128, %s10, [#allocation3]
    $region45: #{tpu_custom_call.1} parent=1 // pred_fallthru
      _
    // Predicated region
    $region46: #{tpu_custom_call.1} parent=1 // pred_check
      _
    $region47: #{tpu_custom_call.1} parent=1 // pred_check_branch
      %419 = sbr.rel (0) target = $region49
    $region48: #{tpu_custom_call.1} parent=1 // pred_region
      _
    $region49: #{tpu_custom_call.1} parent=1 // pred_fallthru
      _
    // Predicated region
    $region50: #{tpu_custom_call.1} parent=1 // pred_check
      _
    $region51: #{tpu_custom_call.1} parent=1 // pred_check_branch
      %421 = sbr.rel (0) target = $region53
    $region52: #{tpu_custom_call.1} parent=1 // pred_region
      %422 = dma.done [#allocation3], 128
    $region53: #{tpu_custom_call.1} parent=1 // pred_fallthru
      _
    %423 = vsyncpa [#allocation3], 1

</llo_original>
